<compile_context>
chip_gen: v5e
topology: v5e:2x2
jax: 0.10.0
libtpu: 0.0.40
codegen_flags: <defaults>
</compile_context>

<pallas_src>
import math

import jax
import jax.numpy as jnp
from jax.experimental import pallas as pl
from jax.experimental.pallas import tpu as pltpu

_TWO_PI = 2.0 * math.pi


def _sincos_kernel(x_ref, w_ref, sin_ref, cos_ref):
    # x_ref:   (1, TILE_B)        f32  -- batch on the lane axis (dense)
    # w_ref:   (half_dim, 1)      f32
    # sin_ref: (half_dim, TILE_B) f32
    # cos_ref: (half_dim, TILE_B) f32
    freqs = (w_ref[...] * x_ref[...]) * _TWO_PI   # (half_dim, TILE_B), VPU outer product
    sin_ref[...] = jnp.sin(freqs)
    cos_ref[...] = jnp.cos(freqs)


def _round_up(n, m):
    return ((n + m - 1) // m) * m


def learned_sinusoidal_pos_emb(x, weights, *, max_tile_b=1024):
    """x: (B,), weights: (half_dim,) -> (B, 1 + 2*half_dim) float32.

    NOTE: for tiny B (a handful of rows) a plain fused-XLA elementwise+concat
    beats the custom-call launch cost; the Pallas path pays off once B is
    large enough to stream through HBM.
    """
    B = int(x.shape[0])
    half_dim = int(weights.shape[0])

    # Lane-dense tiling over B: tile is a multiple of 128 (lane width), kept
    # modest (<= max_tile_b) so double-buffered tiles are a few hundred KiB.
    tile_b = min(_round_up(B, 128), _round_up(max_tile_b, 128))
    b_pad = _round_up(B, tile_b)
    grid = (b_pad // tile_b,)

    x_f32 = x.astype(jnp.float32)
    # Batch on the lane axis; zero-pad the tail tile (harmless, sliced off).
    x_row = jnp.zeros((1, b_pad), jnp.float32).at[0, :B].set(x_f32)
    w_col = weights.reshape(half_dim, 1).astype(jnp.float32)

    sin_t, cos_t = pl.pallas_call(
        _sincos_kernel,
        out_shape=(
            jax.ShapeDtypeStruct((half_dim, b_pad), jnp.float32),
            jax.ShapeDtypeStruct((half_dim, b_pad), jnp.float32),
        ),
        grid=grid,
        in_specs=[
            pl.BlockSpec((1, tile_b), lambda i: (0, i)),
            pl.BlockSpec((half_dim, 1), lambda i: (0, 0)),
        ],
        out_specs=(
            pl.BlockSpec((half_dim, tile_b), lambda i: (0, i)),
            pl.BlockSpec((half_dim, tile_b), lambda i: (0, i)),
        ),
        compiler_params=pltpu.CompilerParams(
            # Tiles are fully independent -> lets v7x split them over 2 TCs.
            dimension_semantics=("parallel",),
        ),
    )(x_row, w_col)

    # Cheap layout plumbing in XLA: drop the padding, transpose back to
    # (B, half_dim), and concat [x | sin | cos] to match PyTorch's output.
    sin = sin_t[:, :B].T
    cos = cos_t[:, :B].T
    return jnp.concatenate([x_f32.reshape(B, 1), sin, cos], axis=-1)


def reference(x, weights):
    x2 = x.reshape(-1, 1).astype(jnp.float32)
    freqs = (x2 * weights.reshape(1, -1).astype(jnp.float32)) * _TWO_PI
    return jnp.concatenate([x2, jnp.sin(freqs), jnp.cos(freqs)], axis=-1)


if __name__ == "__main__":
    dim = 32                  # module arg; must be even
    half_dim = dim // 2
    batch = 8

    key = jax.random.PRNGKey(0)
    k_x, k_w = jax.random.split(key)
    weights = jax.random.normal(k_w, (half_dim,), dtype=jnp.float32)   # torch.randn analogue
    x = jax.random.uniform(k_x, (batch,), dtype=jnp.float32) * 10.0    # scalar timesteps

    out = learned_sinusoidal_pos_emb(x, weights)
    out = jax.block_until_ready(out)

    ref = reference(x, weights)
    assert out.shape == (batch, 1 + dim), out.shape
    assert jnp.allclose(out, ref, atol=2e-5, rtol=2e-5), "mismatch vs reference"

    print("KERNEL_OK")
</pallas_src>

<mosaic_0001>
module attributes {stable_mosaic.version = 11 : i64} {
  func.func @_sincos_kernel(%arg0: i32, %arg1: memref<1x128xf32, #tpu.memory_space<vmem>>, %arg2: memref<16x1xf32, #tpu.memory_space<vmem>>, %arg3: memref<16x128xf32, #tpu.memory_space<vmem>>, %arg4: memref<16x128xf32, #tpu.memory_space<vmem>>) attributes {dimension_semantics = [#tpu.dimension_semantics<parallel>], iteration_bounds = array<i64: 1>, scalar_prefetch = 0 : i64, scratch_operands = 0 : i64, tpu.core_type = #tpu.core_type<tc>, window_params = [{transform_indices = @transform_0, window_bounds = array<i64: 1, 128>}, {pipeline_mode = #tpu.pipeline_mode<synchronous>, transform_indices = @transform_1, window_bounds = array<i64: 16, 1>}, {transform_indices = @transform_2, window_bounds = array<i64: 16, 128>}, {transform_indices = @transform_3, window_bounds = array<i64: 16, 128>}]} {
    %c0 = arith.constant 0 : index
    %c0_0 = arith.constant 0 : index
    %0 = vector.load %arg2[%c0, %c0_0] : memref<16x1xf32, #tpu.memory_space<vmem>>, vector<16x1xf32>
    %c0_1 = arith.constant 0 : index
    %c0_2 = arith.constant 0 : index
    %1 = vector.load %arg1[%c0_1, %c0_2] : memref<1x128xf32, #tpu.memory_space<vmem>>, vector<1x128xf32>
    %2 = vector.broadcast %0 : vector<16x1xf32> to vector<16x128xf32>
    %3 = vector.broadcast %1 : vector<1x128xf32> to vector<16x128xf32>
    %4 = arith.mulf %2, %3 : vector<16x128xf32>
    %cst = arith.constant 6.28318548 : f32
    %5 = vector.broadcast %cst : f32 to vector<16x128xf32>
    %6 = arith.mulf %4, %5 : vector<16x128xf32>
    %7 = math.sin %6 : vector<16x128xf32>
    %c0_3 = arith.constant 0 : index
    %c0_4 = arith.constant 0 : index
    %8 = vector.load %arg3[%c0_3, %c0_4] : memref<16x128xf32, #tpu.memory_space<vmem>>, vector<16x128xf32>
    tpu.vector_store %arg3[%c0_3, %c0_4], %7 {strides = array<i32>} : memref<16x128xf32, #tpu.memory_space<vmem>>, vector<16x128xf32>,
    %9 = math.cos %6 : vector<16x128xf32>
    %c0_5 = arith.constant 0 : index
    %c0_6 = arith.constant 0 : index
    %10 = vector.load %arg4[%c0_5, %c0_6] : memref<16x128xf32, #tpu.memory_space<vmem>>, vector<16x128xf32>
    tpu.vector_store %arg4[%c0_5, %c0_6], %9 {strides = array<i32>} : memref<16x128xf32, #tpu.memory_space<vmem>>, vector<16x128xf32>,
    return
  }
  func.func @transform_0(%arg0: i32) -> (i32, i32) {
    %c0_i32 = arith.constant 0 : i32
    %c0_i32_0 = arith.constant 0 : i32
    return %c0_i32, %arg0 : i32, i32
  }
  func.func @transform_1(%arg0: i32) -> (i32, i32) {
    %c0_i32 = arith.constant 0 : i32
    %c0_i32_0 = arith.constant 0 : i32
    %c0_i32_1 = arith.constant 0 : i32
    return %c0_i32, %c0_i32_0 : i32, i32
  }
  func.func @transform_2(%arg0: i32) -> (i32, i32) {
    %c0_i32 = arith.constant 0 : i32
    %c0_i32_0 = arith.constant 0 : i32
    return %c0_i32, %arg0 : i32, i32
  }
  func.func @transform_3(%arg0: i32) -> (i32, i32) {
    %c0_i32 = arith.constant 0 : i32
    %c0_i32_0 = arith.constant 0 : i32
    return %c0_i32, %arg0 : i32, i32
  }
}

</mosaic_0001>

<llo_original>
// kernel: tpu_custom_call.1
$region0: #{tpu_custom_call.1}
  #allocation0 [shape = 'u32[]', space=smem, size = 0x4, offset = 0x4, fixed_abs, tag = 'smem constant byte address 0x4 - core index']
  #allocation1 [shape = 'u32[72,128]{1,0:T(1,128)}', space=vmem, size = 0x9000, scoped, tag = 'internal scratch']
  %s0 = inlined_call_operand.vmem [shape: f32[1,128], index: 0, kind: input, shape index: {}]
  %s1 = inlined_call_operand.vmem [shape: f32[16,1], index: 1, kind: input, shape index: {}]
  %s2 = inlined_call_operand.hbm [shape: f32[16,128], index: 2, kind: output, shape index: {0}]
  %s3 = inlined_call_operand.hbm [shape: f32[16,128], index: 3, kind: output, shape index: {1}]
  %4 = xla_tuple %s2, %s3
  %s5 = sld [smem:[#allocation0]]
  $region26: #{tpu_custom_call.1} parent=0
    _
  %s7 = ssub.s32 1, %s5
  %s8 = scalar_select 0, %s7, %s5
  $region1: #{tpu_custom_call.1} parent=0
    #allocation2 [shape = 'u8[8192]{0}', space=vmem, size = 0x2000, scoped, tag = 'output window, operand 0, single buffered']
    #allocation3 [shape = 's32[1]{0}', space=sflag, size = 0x4, scoped, tag = 'scoped memory for tpu_custom_call.1']
    #allocation4 [shape = 'u8[8192]{0}', space=vmem, size = 0x2000, scoped, tag = 'output window, operand 1, single buffered']
    #allocation5 [shape = 's32[1]{0}', space=sflag, size = 0x4, scoped, tag = 'scoped memory for tpu_custom_call.1']
    %9 = vsyncpa [#allocation3], 0
    %10 = vsyncpa [#allocation5], 0
    // Predicated region
    $region2: #{tpu_custom_call.1} parent=1 // pred_check
      _
    $region3: #{tpu_custom_call.1} parent=1 // pred_check_branch
      %12 = sbr.rel (0) target = $region5
    $region4: #{tpu_custom_call.1} parent=1 // pred_region
      _
    $region5: #{tpu_custom_call.1} parent=1 // pred_fallthru
      _
    // Predicated region
    $region6: #{tpu_custom_call.1} parent=1 // pred_check
      _
    $region7: #{tpu_custom_call.1} parent=1 // pred_check_branch
      %14 = sbr.rel (0) target = $region9
    $region8: #{tpu_custom_call.1} parent=1 // pred_region
      _
    $region9: #{tpu_custom_call.1} parent=1 // pred_fallthru
      _
    %v15 = vld [vmem:[%s1] sm:$0xff]
    %v16 = vld [vmem:[%s1 + $0x8] sm:$0xff]
    %v17 = vld [vmem:[%s0] sm:$0x1]
    %19 = vset.pattern.permute.xlu0 0
    %20 = vperm.xlu0 %19, %v15
    %v21 = vpop.permute.xlu0 %20
    %24 = vset.pattern.permute.xlu0 0
    %25 = vperm.xlu0 %24, %v16
    %v26 = vpop.permute.xlu0 %25
    %v29 = vperm.slane %v17, 0
    %v31 = vmul.f32 %v21, %v29
    %v32 = vmul.f32 %v26, %v29
    %v33 = vmul.f32 %v31, 6.2831855
    %v34 = vmul.f32 %v32, 6.2831855
    %v35 = vand.u32 2147483647, %v33
    %vm36 = vcmp.le.f32.partialorder %v35, 0.7853982
    %vm37 = vcmp.lt.s32.totalorder %v33, 0
    %v38 = vand.u32 %v33, 2139095040
    %v39 = vshrl.u32 %v38, 23
    %v40 = vsub.s32 %v39, 127
    %v41 = vand.u32 2147483647, %v33
    %v42 = vand.u32 %v41, 8388607
    %v43 = vor.u32 %v42, 8388608
    %v44 = vsub.s32 0, %v43
    %v45 = vadd.s32 %v40, 1
    %vm46 = vcmp.gt.s32.totalorder %v45, 0
    %v47 = vsel %vm46, %v45, 0
    %v48 = vshrl.u32 %v47, 5
    %v49 = vand.u32 %v47, 31
    %v50 = vsub.s32 32, %v49
    %v51 = vshrl.u32 683565275, %v50
    %v52 = vshll.u32 683565275, %v49
    %v53 = vshrl.u32 2475754826, %v50
    %v54 = vor.u32 %v52, %v53
    %v55 = vshll.u32 2475754826, %v49
    %v56 = vshrl.u32 2131351028, %v50
    %v57 = vor.u32 %v55, %v56
    %v58 = vshll.u32 2131351028, %v49
    %v59 = vshrl.u32 2102212464, %v50
    %v60 = vor.u32 %v58, %v59
    %v61 = vshll.u32 2102212464, %v49
    %v62 = vshrl.u32 920167782, %v50
    %v63 = vor.u32 %v61, %v62
    %v64 = vshll.u32 920167782, %v49
    %v65 = vshrl.u32 1326507024, %v50
    %v66 = vor.u32 %v64, %v65
    %vm67 = vcmp.lt.s32.totalorder %v48, 1
    %vm68 = vcmp.lt.s32.totalorder %v48, 2
    %vm69 = vcmp.lt.s32.totalorder %v48, 3
    %vm70 = vcmp.lt.s32.totalorder %v48, 4
    %v71 = vsel %vm67, %v51, %v54
    %v72 = vsel %vm70, %v60, 2102212464
    %v73 = vsel %vm69, %v57, %v72
    %v74 = vsel %vm68, %v71, %v73
    %v75 = vsel %vm67, %v54, %v57
    %v76 = vsel %vm70, %v63, 920167782
    %v77 = vsel %vm69, %v60, %v76
    %v78 = vsel %vm68, %v75, %v77
    %v79 = vsel %vm67, %v57, %v60
    %v80 = vsel %vm70, %v66, 1326507024
    %v81 = vsel %vm69, %v63, %v80
    %v82 = vsel %vm68, %v79, %v81
    %v83 = vshll.u32 %v43, 8
    %v84 = vand.u32 %v83, 65535
    %v85 = vshrl.u32 %v83, 16
    %v86 = vand.u32 %v82, 65535
    %v87 = vshrl.u32 %v82, 16
    %v88 = vmul.u32 %v84, %v86
    %v89 = vmul.u32 %v84, %v87
    %v90 = vmul.u32 %v85, %v86
    %v91 = vmul.u32 %v85, %v87
    %v92 = vshll.u32 %v89, 16
    %v93 = vshrl.u32 %v89, 16
    %v94 = vshll.u32 %v90, 16
    %v95 = vshrl.u32 %v90, 16
    %vm96 = vc.u32 %v88, %v92
    %v97 = vsel %vm96, 1, 0
    %v98 = vadd.s32 %v88, %v92
    %v99 = vadd.s32 %v91, %v97
    %vm100 = vc.u32 %v98, %v94
    %v101 = vsel %vm100, 1, 0
    %v102 = vadd.s32 %v98, %v94
    %v103 = vadd.s32 %v99, %v101
    %v104 = vadd.s32 %v103, %v93
    %v105 = vadd.s32 %v104, %v95
    %v106 = vand.u32 %v83, 65535
    %v107 = vshrl.u32 %v83, 16
    %v108 = vand.u32 %v78, 65535
    %v109 = vshrl.u32 %v78, 16
    %v110 = vmul.u32 %v106, %v108
    %v111 = vmul.u32 %v106, %v109
    %v112 = vmul.u32 %v107, %v108
    %v113 = vmul.u32 %v107, %v109
    %v114 = vshll.u32 %v111, 16
    %v115 = vshrl.u32 %v111, 16
    %v116 = vshll.u32 %v112, 16
    %v117 = vshrl.u32 %v112, 16
    %vm118 = vc.u32 %v110, %v114
    %v119 = vsel %vm118, 1, 0
    %v120 = vadd.s32 %v110, %v114
    %v121 = vadd.s32 %v113, %v119
    %vm122 = vc.u32 %v120, %v116
    %v123 = vsel %vm122, 1, 0
    %v124 = vadd.s32 %v120, %v116
    %v125 = vadd.s32 %v121, %v123
    %v126 = vadd.s32 %v125, %v115
    %v127 = vadd.s32 %v126, %v117
    %v128 = vmul.u32 %v83, %v74
    %v129 = vadd.s32 %v105, %v124
    %vm130 = vc.u32 %v105, %v124
    %v131 = vadd.s32 %v127, 1
    %v132 = vsel %vm130, %v131, %v127
    %v133 = vadd.s32 %v128, %v132
    %v134 = vadd.s32 %v133, 536870912
    %v135 = vshrl.u32 %v134, 30
    %v136 = vshll.u32 %v135, 30
    %v137 = vsub.s32 %v133, %v136
    %vm138 = vcmp.lt.s32.totalorder %v137, 0
    %v139 = vsub.s32 0, %v137
    %v140 = vsel %vm138, %v139, %v137
    %v141 = vclz %v140
    %v142 = vsub.s32 %v141, 2
    %vm143 = vcmp.gt.s32.totalorder 0, %v142
    %v144 = vsel %vm143, 0, %v142
    %v145 = vsub.s32 32, %v144
    %v146 = vshll.u32 %v137, %v144
    %v147 = vshrl.u32 %v129, %v145
    %v148 = vor.u32 %v146, %v147
    %v149 = vsub.s32 4294967266, %v144
    %v150 = vadd.s32 %v149, 127
    %v151 = vshll.u32 %v150, 23
    %v152 = vor.u32 4788187, %v151
    %v153 = vand.u32 2147483647, %v152
    %v155 = vcvt.s32.f32 %v148
    %v156 = vmul.f32 %v155, %v153
    %v157 = vxor.u32 %v156, 2147483648
    %v158 = vsel %vm37, %v157, %v156
    %v159 = vsub.s32 4, %v135
    %v160 = vsel %vm37, %v159, %v135
    %v161 = vsel %vm36, %v33, %v158
    %v162 = vsel %vm36, 0, %v160
    %v163 = vmul.f32 %v161, %v161
    %v164 = vmul.f32 %v163, -0.001358992
    %v165 = vadd.f32 %v164, 0.041655596
    %v166 = vmul.f32 %v163, %v165
    %v167 = vadd.f32 %v166, -0.4999988
    %v168 = vmul.f32 %v163, %v167
    %v169 = vadd.f32 1.0, %v168
    %v170 = vmul.f32 %v161, %v161
    %v171 = vmul.f32 %v170, -0.00019511016
    %v172 = vadd.f32 %v171, 0.008332121
    %v173 = vmul.f32 %v170, %v172
    %v174 = vadd.f32 %v173, -0.16666654
    %v175 = vmul.f32 %v170, %v174
    %v176 = vadd.f32 %v175, 1.0
    %v177 = vmul.f32 %v176, %v161
    %vm178 = vweird.f32 %v33
    %v179 = vadd.s32 %v162, 3
    %v180 = vand.u32 %v179, 3
    %vm181 = vcmp.lt.s32.totalorder %v180, 2
    %vm182 = vcmp.eq.s32.totalorder %v180, 0
    %v183 = vxor.u32 %v177, 2147483648
    %v184 = vsel %vm182, %v169, %v183
    %vm185 = vcmp.eq.s32.totalorder %v180, 2
    %v186 = vxor.u32 %v169, 2147483648
    %v187 = vsel %vm185, %v186, %v177
    %v188 = vsel %vm181, %v184, %v187
    %v189 = vsel %vm178, nan, %v188
    %v190 = vand.u32 2147483647, %v34
    %vm191 = vcmp.le.f32.partialorder %v190, 0.7853982
    %vm192 = vcmp.lt.s32.totalorder %v34, 0
    %v193 = vand.u32 %v34, 2139095040
    %v194 = vshrl.u32 %v193, 23
    %v195 = vsub.s32 %v194, 127
    %v196 = vand.u32 2147483647, %v34
    %v197 = vand.u32 %v196, 8388607
    %v198 = vor.u32 %v197, 8388608
    %v199 = vsub.s32 0, %v198
    %v200 = vadd.s32 %v195, 1
    %vm201 = vcmp.gt.s32.totalorder %v200, 0
    %v202 = vsel %vm201, %v200, 0
    %v203 = vshrl.u32 %v202, 5
    %v204 = vand.u32 %v202, 31
    %v205 = vsub.s32 32, %v204
    %v206 = vshrl.u32 683565275, %v205
    %v207 = vshll.u32 683565275, %v204
    %v208 = vshrl.u32 2475754826, %v205
    %v209 = vor.u32 %v207, %v208
    %v210 = vshll.u32 2475754826, %v204
    %v211 = vshrl.u32 2131351028, %v205
    %v212 = vor.u32 %v210, %v211
    %v213 = vshll.u32 2131351028, %v204
    %v214 = vshrl.u32 2102212464, %v205
    %v215 = vor.u32 %v213, %v214
    %v216 = vshll.u32 2102212464, %v204
    %v217 = vshrl.u32 920167782, %v205
    %v218 = vor.u32 %v216, %v217
    %v219 = vshll.u32 920167782, %v204
    %v220 = vshrl.u32 1326507024, %v205
    %v221 = vor.u32 %v219, %v220
    %vm222 = vcmp.lt.s32.totalorder %v203, 1
    %vm223 = vcmp.lt.s32.totalorder %v203, 2
    %vm224 = vcmp.lt.s32.totalorder %v203, 3
    %vm225 = vcmp.lt.s32.totalorder %v203, 4
    %v226 = vsel %vm222, %v206, %v209
    %v227 = vsel %vm225, %v215, 2102212464
    %v228 = vsel %vm224, %v212, %v227
    %v229 = vsel %vm223, %v226, %v228
    %v230 = vsel %vm222, %v209, %v212
    %v231 = vsel %vm225, %v218, 920167782
    %v232 = vsel %vm224, %v215, %v231
    %v233 = vsel %vm223, %v230, %v232
    %v234 = vsel %vm222, %v212, %v215
    %v235 = vsel %vm225, %v221, 1326507024
    %v236 = vsel %vm224, %v218, %v235
    %v237 = vsel %vm223, %v234, %v236
    %v238 = vshll.u32 %v198, 8
    %v239 = vand.u32 %v238, 65535
    %v240 = vshrl.u32 %v238, 16
    %v241 = vand.u32 %v237, 65535
    %v242 = vshrl.u32 %v237, 16
    %v243 = vmul.u32 %v239, %v241
    %v244 = vmul.u32 %v239, %v242
    %v245 = vmul.u32 %v240, %v241
    %v246 = vmul.u32 %v240, %v242
    %v247 = vshll.u32 %v244, 16
    %v248 = vshrl.u32 %v244, 16
    %v249 = vshll.u32 %v245, 16
    %v250 = vshrl.u32 %v245, 16
    %vm251 = vc.u32 %v243, %v247
    %v252 = vsel %vm251, 1, 0
    %v253 = vadd.s32 %v243, %v247
    %v254 = vadd.s32 %v246, %v252
    %vm255 = vc.u32 %v253, %v249
    %v256 = vsel %vm255, 1, 0
    %v257 = vadd.s32 %v253, %v249
    %v258 = vadd.s32 %v254, %v256
    %v259 = vadd.s32 %v258, %v248
    %v260 = vadd.s32 %v259, %v250
    %v261 = vand.u32 %v238, 65535
    %v262 = vshrl.u32 %v238, 16
    %v263 = vand.u32 %v233, 65535
    %v264 = vshrl.u32 %v233, 16
    %v265 = vmul.u32 %v261, %v263
    %v266 = vmul.u32 %v261, %v264
    %v267 = vmul.u32 %v262, %v263
    %v268 = vmul.u32 %v262, %v264
    %v269 = vshll.u32 %v266, 16
    %v270 = vshrl.u32 %v266, 16
    %v271 = vshll.u32 %v267, 16
    %v272 = vshrl.u32 %v267, 16
    %vm273 = vc.u32 %v265, %v269
    %v274 = vsel %vm273, 1, 0
    %v275 = vadd.s32 %v265, %v269
    %v276 = vadd.s32 %v268, %v274
    %vm277 = vc.u32 %v275, %v271
    %v278 = vsel %vm277, 1, 0
    %v279 = vadd.s32 %v275, %v271
    %v280 = vadd.s32 %v276, %v278
    %v281 = vadd.s32 %v280, %v270
    %v282 = vadd.s32 %v281, %v272
    %v283 = vmul.u32 %v238, %v229
    %v284 = vadd.s32 %v260, %v279
    %vm285 = vc.u32 %v260, %v279
    %v286 = vadd.s32 %v282, 1
    %v287 = vsel %vm285, %v286, %v282
    %v288 = vadd.s32 %v283, %v287
    %v289 = vadd.s32 %v288, 536870912
    %v290 = vshrl.u32 %v289, 30
    %v291 = vshll.u32 %v290, 30
    %v292 = vsub.s32 %v288, %v291
    %vm293 = vcmp.lt.s32.totalorder %v292, 0
    %v294 = vsub.s32 0, %v292
    %v295 = vsel %vm293, %v294, %v292
    %v296 = vclz %v295
    %v297 = vsub.s32 %v296, 2
    %vm298 = vcmp.gt.s32.totalorder 0, %v297
    %v299 = vsel %vm298, 0, %v297
    %v300 = vsub.s32 32, %v299
    %v301 = vshll.u32 %v292, %v299
    %v302 = vshrl.u32 %v284, %v300
    %v303 = vor.u32 %v301, %v302
    %v304 = vsub.s32 4294967266, %v299
    %v305 = vadd.s32 %v304, 127
    %v306 = vshll.u32 %v305, 23
    %v307 = vor.u32 4788187, %v306
    %v308 = vand.u32 2147483647, %v307
    %v310 = vcvt.s32.f32 %v303
    %v311 = vmul.f32 %v310, %v308
    %v312 = vxor.u32 %v311, 2147483648
    %v313 = vsel %vm192, %v312, %v311
    %v314 = vsub.s32 4, %v290
    %v315 = vsel %vm192, %v314, %v290
    %v316 = vsel %vm191, %v34, %v313
    %v317 = vsel %vm191, 0, %v315
    %v318 = vmul.f32 %v316, %v316
    %v319 = vmul.f32 %v318, -0.001358992
    %v320 = vadd.f32 %v319, 0.041655596
    %v321 = vmul.f32 %v318, %v320
    %v322 = vadd.f32 %v321, -0.4999988
    %v323 = vmul.f32 %v318, %v322
    %v324 = vadd.f32 1.0, %v323
    %v325 = vmul.f32 %v316, %v316
    %v326 = vmul.f32 %v325, -0.00019511016
    %v327 = vadd.f32 %v326, 0.008332121
    %v328 = vmul.f32 %v325, %v327
    %v329 = vadd.f32 %v328, -0.16666654
    %v330 = vmul.f32 %v325, %v329
    %v331 = vadd.f32 %v330, 1.0
    %v332 = vmul.f32 %v331, %v316
    %vm333 = vweird.f32 %v34
    %v334 = vadd.s32 %v317, 3
    %v335 = vand.u32 %v334, 3
    %vm336 = vcmp.lt.s32.totalorder %v335, 2
    %vm337 = vcmp.eq.s32.totalorder %v335, 0
    %v338 = vxor.u32 %v332, 2147483648
    %v339 = vsel %vm337, %v324, %v338
    %vm340 = vcmp.eq.s32.totalorder %v335, 2
    %v341 = vxor.u32 %v324, 2147483648
    %v342 = vsel %vm340, %v341, %v332
    %v343 = vsel %vm336, %v339, %v342
    %v344 = vsel %vm333, nan, %v343
    %345 = vst [vmem:[#allocation2] sm:$0xff] %v189
    %346 = vst [vmem:[#allocation2 + $0x8] sm:$0xff] %v344
    %v347 = vand.u32 2147483647, %v33
    %vm348 = vcmp.le.f32.partialorder %v347, 0.7853982
    %vm349 = vcmp.lt.s32.totalorder %v33, 0
    %v350 = vand.u32 %v33, 2139095040
    %v351 = vshrl.u32 %v350, 23
    %v352 = vsub.s32 %v351, 127
    %v353 = vand.u32 2147483647, %v33
    %v354 = vand.u32 %v353, 8388607
    %v355 = vor.u32 %v354, 8388608
    %v356 = vsub.s32 0, %v355
    %v357 = vadd.s32 %v352, 1
    %vm358 = vcmp.gt.s32.totalorder %v357, 0
    %v359 = vsel %vm358, %v357, 0
    %v360 = vshrl.u32 %v359, 5
    %v361 = vand.u32 %v359, 31
    %v362 = vsub.s32 32, %v361
    %v363 = vshrl.u32 683565275, %v362
    %v364 = vshll.u32 683565275, %v361
    %v365 = vshrl.u32 2475754826, %v362
    %v366 = vor.u32 %v364, %v365
    %v367 = vshll.u32 2475754826, %v361
    %v368 = vshrl.u32 2131351028, %v362
    %v369 = vor.u32 %v367, %v368
    %v370 = vshll.u32 2131351028, %v361
    %v371 = vshrl.u32 2102212464, %v362
    %v372 = vor.u32 %v370, %v371
    %v373 = vshll.u32 2102212464, %v361
    %v374 = vshrl.u32 920167782, %v362
    %v375 = vor.u32 %v373, %v374
    %v376 = vshll.u32 920167782, %v361
    %v377 = vshrl.u32 1326507024, %v362
    %v378 = vor.u32 %v376, %v377
    %vm379 = vcmp.lt.s32.totalorder %v360, 1
    %vm380 = vcmp.lt.s32.totalorder %v360, 2
    %vm381 = vcmp.lt.s32.totalorder %v360, 3
    %vm382 = vcmp.lt.s32.totalorder %v360, 4
    %v383 = vsel %vm379, %v363, %v366
    %v384 = vsel %vm382, %v372, 2102212464
    %v385 = vsel %vm381, %v369, %v384
    %v386 = vsel %vm380, %v383, %v385
    %v387 = vsel %vm379, %v366, %v369
    %v388 = vsel %vm382, %v375, 920167782
    %v389 = vsel %vm381, %v372, %v388
    %v390 = vsel %vm380, %v387, %v389
    %v391 = vsel %vm379, %v369, %v372
    %v392 = vsel %vm382, %v378, 1326507024
    %v393 = vsel %vm381, %v375, %v392
    %v394 = vsel %vm380, %v391, %v393
    %v395 = vshll.u32 %v355, 8
    %v396 = vand.u32 %v395, 65535
    %v397 = vshrl.u32 %v395, 16
    %v398 = vand.u32 %v394, 65535
    %v399 = vshrl.u32 %v394, 16
    %v400 = vmul.u32 %v396, %v398
    %v401 = vmul.u32 %v396, %v399
    %v402 = vmul.u32 %v397, %v398
    %v403 = vmul.u32 %v397, %v399
    %v404 = vshll.u32 %v401, 16
    %v405 = vshrl.u32 %v401, 16
    %v406 = vshll.u32 %v402, 16
    %v407 = vshrl.u32 %v402, 16
    %vm408 = vc.u32 %v400, %v404
    %v409 = vsel %vm408, 1, 0
    %v410 = vadd.s32 %v400, %v404
    %v411 = vadd.s32 %v403, %v409
    %vm412 = vc.u32 %v410, %v406
    %v413 = vsel %vm412, 1, 0
    %v414 = vadd.s32 %v410, %v406
    %v415 = vadd.s32 %v411, %v413
    %v416 = vadd.s32 %v415, %v405
    %v417 = vadd.s32 %v416, %v407
    %v418 = vand.u32 %v395, 65535
    %v419 = vshrl.u32 %v395, 16
    %v420 = vand.u32 %v390, 65535
    %v421 = vshrl.u32 %v390, 16
    %v422 = vmul.u32 %v418, %v420
    %v423 = vmul.u32 %v418, %v421
    %v424 = vmul.u32 %v419, %v420
    %v425 = vmul.u32 %v419, %v421
    %v426 = vshll.u32 %v423, 16
    %v427 = vshrl.u32 %v423, 16
    %v428 = vshll.u32 %v424, 16
    %v429 = vshrl.u32 %v424, 16
    %vm430 = vc.u32 %v422, %v426
    %v431 = vsel %vm430, 1, 0
    %v432 = vadd.s32 %v422, %v426
    %v433 = vadd.s32 %v425, %v431
    %vm434 = vc.u32 %v432, %v428
    %v435 = vsel %vm434, 1, 0
    %v436 = vadd.s32 %v432, %v428
    %v437 = vadd.s32 %v433, %v435
    %v438 = vadd.s32 %v437, %v427
    %v439 = vadd.s32 %v438, %v429
    %v440 = vmul.u32 %v395, %v386
    %v441 = vadd.s32 %v417, %v436
    %vm442 = vc.u32 %v417, %v436
    %v443 = vadd.s32 %v439, 1
    %v444 = vsel %vm442, %v443, %v439
    %v445 = vadd.s32 %v440, %v444
    %v446 = vadd.s32 %v445, 536870912
    %v447 = vshrl.u32 %v446, 30
    %v448 = vshll.u32 %v447, 30
    %v449 = vsub.s32 %v445, %v448
    %vm450 = vcmp.lt.s32.totalorder %v449, 0
    %v451 = vsub.s32 0, %v449
    %v452 = vsel %vm450, %v451, %v449
    %v453 = vclz %v452
    %v454 = vsub.s32 %v453, 2
    %vm455 = vcmp.gt.s32.totalorder 0, %v454
    %v456 = vsel %vm455, 0, %v454
    %v457 = vsub.s32 32, %v456
    %v458 = vshll.u32 %v449, %v456
    %v459 = vshrl.u32 %v441, %v457
    %v460 = vor.u32 %v458, %v459
    %v461 = vsub.s32 4294967266, %v456
    %v462 = vadd.s32 %v461, 127
    %v463 = vshll.u32 %v462, 23
    %v464 = vor.u32 4788187, %v463
    %v465 = vand.u32 2147483647, %v464
    %v467 = vcvt.s32.f32 %v460
    %v468 = vmul.f32 %v467, %v465
    %v469 = vxor.u32 %v468, 2147483648
    %v470 = vsel %vm349, %v469, %v468
    %v471 = vsub.s32 4, %v447
    %v472 = vsel %vm349, %v471, %v447
    %v473 = vsel %vm348, %v33, %v470
    %v474 = vsel %vm348, 0, %v472
    %v475 = vmul.f32 %v473, %v473
    %v476 = vmul.f32 %v475, -0.001358992
    %v477 = vadd.f32 %v476, 0.041655596
    %v478 = vmul.f32 %v475, %v477
    %v479 = vadd.f32 %v478, -0.4999988
    %v480 = vmul.f32 %v475, %v479
    %v481 = vadd.f32 1.0, %v480
    %v482 = vmul.f32 %v473, %v473
    %v483 = vmul.f32 %v482, -0.00019511016
    %v484 = vadd.f32 %v483, 0.008332121
    %v485 = vmul.f32 %v482, %v484
    %v486 = vadd.f32 %v485, -0.16666654
    %v487 = vmul.f32 %v482, %v486
    %v488 = vadd.f32 %v487, 1.0
    %v489 = vmul.f32 %v488, %v473
    %vm490 = vweird.f32 %v33
    %v491 = vand.u32 %v474, 3
    %vm492 = vcmp.lt.s32.totalorder %v491, 2
    %vm493 = vcmp.eq.s32.totalorder %v491, 0
    %v494 = vxor.u32 %v489, 2147483648
    %v495 = vsel %vm493, %v481, %v494
    %vm496 = vcmp.eq.s32.totalorder %v491, 2
    %v497 = vxor.u32 %v481, 2147483648
    %v498 = vsel %vm496, %v497, %v489
    %v499 = vsel %vm492, %v495, %v498
    %v500 = vsel %vm490, nan, %v499
    %v501 = vand.u32 2147483647, %v34
    %vm502 = vcmp.le.f32.partialorder %v501, 0.7853982
    %vm503 = vcmp.lt.s32.totalorder %v34, 0
    %v504 = vand.u32 %v34, 2139095040
    %v505 = vshrl.u32 %v504, 23
    %v506 = vsub.s32 %v505, 127
    %v507 = vand.u32 2147483647, %v34
    %v508 = vand.u32 %v507, 8388607
    %v509 = vor.u32 %v508, 8388608
    %v510 = vsub.s32 0, %v509
    %v511 = vadd.s32 %v506, 1
    %vm512 = vcmp.gt.s32.totalorder %v511, 0
    %v513 = vsel %vm512, %v511, 0
    %v514 = vshrl.u32 %v513, 5
    %v515 = vand.u32 %v513, 31
    %v516 = vsub.s32 32, %v515
    %v517 = vshrl.u32 683565275, %v516
    %v518 = vshll.u32 683565275, %v515
    %v519 = vshrl.u32 2475754826, %v516
    %v520 = vor.u32 %v518, %v519
    %v521 = vshll.u32 2475754826, %v515
    %v522 = vshrl.u32 2131351028, %v516
    %v523 = vor.u32 %v521, %v522
    %v524 = vshll.u32 2131351028, %v515
    %v525 = vshrl.u32 2102212464, %v516
    %v526 = vor.u32 %v524, %v525
    %v527 = vshll.u32 2102212464, %v515
    %v528 = vshrl.u32 920167782, %v516
    %v529 = vor.u32 %v527, %v528
    %v530 = vshll.u32 920167782, %v515
    %v531 = vshrl.u32 1326507024, %v516
    %v532 = vor.u32 %v530, %v531
    %vm533 = vcmp.lt.s32.totalorder %v514, 1
    %vm534 = vcmp.lt.s32.totalorder %v514, 2
    %vm535 = vcmp.lt.s32.totalorder %v514, 3
    %vm536 = vcmp.lt.s32.totalorder %v514, 4
    %v537 = vsel %vm533, %v517, %v520
    %v538 = vsel %vm536, %v526, 2102212464
    %v539 = vsel %vm535, %v523, %v538
    %v540 = vsel %vm534, %v537, %v539
    %v541 = vsel %vm533, %v520, %v523
    %v542 = vsel %vm536, %v529, 920167782
    %v543 = vsel %vm535, %v526, %v542
    %v544 = vsel %vm534, %v541, %v543
    %v545 = vsel %vm533, %v523, %v526
    %v546 = vsel %vm536, %v532, 1326507024
    %v547 = vsel %vm535, %v529, %v546
    %v548 = vsel %vm534, %v545, %v547
    %v549 = vshll.u32 %v509, 8
    %v550 = vand.u32 %v549, 65535
    %v551 = vshrl.u32 %v549, 16
    %v552 = vand.u32 %v548, 65535
    %v553 = vshrl.u32 %v548, 16
    %v554 = vmul.u32 %v550, %v552
    %v555 = vmul.u32 %v550, %v553
    %v556 = vmul.u32 %v551, %v552
    %v557 = vmul.u32 %v551, %v553
    %v558 = vshll.u32 %v555, 16
    %v559 = vshrl.u32 %v555, 16
    %v560 = vshll.u32 %v556, 16
    %v561 = vshrl.u32 %v556, 16
    %vm562 = vc.u32 %v554, %v558
    %v563 = vsel %vm562, 1, 0
    %v564 = vadd.s32 %v554, %v558
    %v565 = vadd.s32 %v557, %v563
    %vm566 = vc.u32 %v564, %v560
    %v567 = vsel %vm566, 1, 0
    %v568 = vadd.s32 %v564, %v560
    %v569 = vadd.s32 %v565, %v567
    %v570 = vadd.s32 %v569, %v559
    %v571 = vadd.s32 %v570, %v561
    %v572 = vand.u32 %v549, 65535
    %v573 = vshrl.u32 %v549, 16
    %v574 = vand.u32 %v544, 65535
    %v575 = vshrl.u32 %v544, 16
    %v576 = vmul.u32 %v572, %v574
    %v577 = vmul.u32 %v572, %v575
    %v578 = vmul.u32 %v573, %v574
    %v579 = vmul.u32 %v573, %v575
    %v580 = vshll.u32 %v577, 16
    %v581 = vshrl.u32 %v577, 16
    %v582 = vshll.u32 %v578, 16
    %v583 = vshrl.u32 %v578, 16
    %vm584 = vc.u32 %v576, %v580
    %v585 = vsel %vm584, 1, 0
    %v586 = vadd.s32 %v576, %v580
    %v587 = vadd.s32 %v579, %v585
    %vm588 = vc.u32 %v586, %v582
    %v589 = vsel %vm588, 1, 0
    %v590 = vadd.s32 %v586, %v582
    %v591 = vadd.s32 %v587, %v589
    %v592 = vadd.s32 %v591, %v581
    %v593 = vadd.s32 %v592, %v583
    %v594 = vmul.u32 %v549, %v540
    %v595 = vadd.s32 %v571, %v590
    %vm596 = vc.u32 %v571, %v590
    %v597 = vadd.s32 %v593, 1
    %v598 = vsel %vm596, %v597, %v593
    %v599 = vadd.s32 %v594, %v598
    %v600 = vadd.s32 %v599, 536870912
    %v601 = vshrl.u32 %v600, 30
    %v602 = vshll.u32 %v601, 30
    %v603 = vsub.s32 %v599, %v602
    %vm604 = vcmp.lt.s32.totalorder %v603, 0
    %v605 = vsub.s32 0, %v603
    %v606 = vsel %vm604, %v605, %v603
    %v607 = vclz %v606
    %v608 = vsub.s32 %v607, 2
    %vm609 = vcmp.gt.s32.totalorder 0, %v608
    %v610 = vsel %vm609, 0, %v608
    %v611 = vsub.s32 32, %v610
    %v612 = vshll.u32 %v603, %v610
    %v613 = vshrl.u32 %v595, %v611
    %v614 = vor.u32 %v612, %v613
    %v615 = vsub.s32 4294967266, %v610
    %v616 = vadd.s32 %v615, 127
    %v617 = vshll.u32 %v616, 23
    %v618 = vor.u32 4788187, %v617
    %v619 = vand.u32 2147483647, %v618
    %v621 = vcvt.s32.f32 %v614
    %v622 = vmul.f32 %v621, %v619
    %v623 = vxor.u32 %v622, 2147483648
    %v624 = vsel %vm503, %v623, %v622
    %v625 = vsub.s32 4, %v601
    %v626 = vsel %vm503, %v625, %v601
    %v627 = vsel %vm502, %v34, %v624
    %v628 = vsel %vm502, 0, %v626
    %v629 = vmul.f32 %v627, %v627
    %v630 = vmul.f32 %v629, -0.001358992
    %v631 = vadd.f32 %v630, 0.041655596
    %v632 = vmul.f32 %v629, %v631
    %v633 = vadd.f32 %v632, -0.4999988
    %v634 = vmul.f32 %v629, %v633
    %v635 = vadd.f32 1.0, %v634
    %v636 = vmul.f32 %v627, %v627
    %v637 = vmul.f32 %v636, -0.00019511016
    %v638 = vadd.f32 %v637, 0.008332121
    %v639 = vmul.f32 %v636, %v638
    %v640 = vadd.f32 %v639, -0.16666654
    %v641 = vmul.f32 %v636, %v640
    %v642 = vadd.f32 %v641, 1.0
    %v643 = vmul.f32 %v642, %v627
    %vm644 = vweird.f32 %v34
    %v645 = vand.u32 %v628, 3
    %vm646 = vcmp.lt.s32.totalorder %v645, 2
    %vm647 = vcmp.eq.s32.totalorder %v645, 0
    %v648 = vxor.u32 %v643, 2147483648
    %v649 = vsel %vm647, %v635, %v648
    %vm650 = vcmp.eq.s32.totalorder %v645, 2
    %v651 = vxor.u32 %v635, 2147483648
    %v652 = vsel %vm650, %v651, %v643
    %v653 = vsel %vm646, %v649, %v652
    %v654 = vsel %vm644, nan, %v653
    %655 = vst [vmem:[#allocation4] sm:$0xff] %v500
    %656 = vst [vmem:[#allocation4 + $0x8] sm:$0xff] %v654
    // Predicated region
    $region10: #{tpu_custom_call.1} parent=1 // pred_check
      _
    $region11: #{tpu_custom_call.1} parent=1 // pred_check_branch
      %658 = sbr.rel (0) target = $region13
    $region12: #{tpu_custom_call.1} parent=1 // pred_region
      %660 = vsyncadd [#allocation3], 0
      %s661 = sshll.u32 [#allocation2], 4
      %s662 = int_to_ptr.vmem [resolvable:$true] %s661
      %s663 = sshll.u32 %s2, 4
      %s664 = int_to_ptr.hbm [resolvable:$true] %s663
      %669 = dma.vmem_to_hbm [thread:$0]  %s662, 256, %s664, [#allocation3], 128, 128, 8
    $region13: #{tpu_custom_call.1} parent=1 // pred_fallthru
      _
    // Predicated region
    $region14: #{tpu_custom_call.1} parent=1 // pred_check
      _
    $region15: #{tpu_custom_call.1} parent=1 // pred_check_branch
      %671 = sbr.rel (0) target = $region17
    $region16: #{tpu_custom_call.1} parent=1 // pred_region
      %673 = vsyncadd [#allocation5], 0
      %s674 = sshll.u32 [#allocation4], 4
      %s675 = int_to_ptr.vmem [resolvable:$true] %s674
      %s676 = sshll.u32 %s3, 4
      %s677 = int_to_ptr.hbm [resolvable:$true] %s676
      %682 = dma.vmem_to_hbm [thread:$0]  %s675, 256, %s677, [#allocation5], 128, 128, 8
    $region17: #{tpu_custom_call.1} parent=1 // pred_fallthru
      _
    // Predicated region
    $region18: #{tpu_custom_call.1} parent=1 // pred_check
      _
    $region19: #{tpu_custom_call.1} parent=1 // pred_check_branch
      %684 = sbr.rel (0) target = $region21
    $region20: #{tpu_custom_call.1} parent=1 // pred_region
      %686 = dma.done [#allocation3], 256
    $region21: #{tpu_custom_call.1} parent=1 // pred_fallthru
      _
    // Predicated region
    $region22: #{tpu_custom_call.1} parent=1 // pred_check
      _
    $region23: #{tpu_custom_call.1} parent=1 // pred_check_branch
      %688 = sbr.rel (0) target = $region25
    $region24: #{tpu_custom_call.1} parent=1 // pred_region
      %690 = dma.done [#allocation5], 256
    $region25: #{tpu_custom_call.1} parent=1 // pred_fallthru
      _
    %691 = vsyncpa [#allocation3], 1
    %692 = vsyncpa [#allocation5], 1

</llo_original>
